<compile_context>
chip_gen: v6e
topology: v6e:2x2x1
jax: 0.10.0
libtpu: 0.0.40
codegen_flags: <defaults>
</compile_context>

<pallas_src>
import jax
import jax.numpy as jnp
import numpy as np
from jax.experimental import pallas as pl
from jax.experimental.pallas import tpu as pltpu

K = 9             # conv kernel size (both convs)
IN_SIZE = 29      # input_size
L1 = IN_SIZE - K + 1          # 21  (conv1 output length)
P = L1 // 2                   # 10  (maxpool output length; position 20 is dropped)
L2 = P - K + 1                # 2   (conv2 output length == final_conv_size)
C1 = 64
C2 = 128
H = 64
OUT_PAD = 128                 # lane-dense output width; column 0 holds the real output


def cnn_kernel(x_ref, w1_ref, b1_ref, w2_ref, b2_ref,
               wf1_ref, bf1_ref, wf2_ref, bf2_ref, o_ref):
    """Fused forward for one batch tile.

    x_ref   : (TB, 29)
    w1_ref  : (29, 1280)   conv1 folded, lanes = half*640 + i*64 + oc (t = 2*i + half)
    b1_ref  : (1, 1280)
    w2_ref  : (640, 256)   conv2 folded, rows = i*64 + ic, lanes = t*128 + oc2
    b2_ref  : (1, 256)
    wf1_ref : (256, 64)    fc1 with PyTorch flatten order (oc2*2 + t) folded in
    bf1_ref : (1, 64)
    wf2_ref : (64, 128)    fc2 zero-padded to 128 lanes (col 0 real)
    bf2_ref : (1, 128)
    o_ref   : (TB, 128)    sigmoid output slab (col 0 real)
    """
    x = x_ref[...]                                                        # (TB, 29)

    # conv1 (only the 20 positions the pool uses) + bias + ReLU
    c1 = jnp.dot(x, w1_ref[...], preferred_element_type=jnp.float32) + b1_ref[...]
    c1 = jnp.maximum(c1, 0.0)                                             # (TB, 1280)

    # MaxPool1d(2): even-time half vs odd-time half (single vector max)
    pool = jnp.maximum(c1[:, :P * C1], c1[:, P * C1:])                    # (TB, 640)

    # conv2 (window folded into w2) + bias + ReLU
    c2 = jnp.dot(pool, w2_ref[...], preferred_element_type=jnp.float32) + b2_ref[...]
    c2 = jnp.maximum(c2, 0.0)                                             # (TB, 256)

    # Flatten (order folded into wf1) + fc1 + ReLU
    h = jnp.dot(c2, wf1_ref[...], preferred_element_type=jnp.float32) + bf1_ref[...]
    h = jnp.maximum(h, 0.0)                                               # (TB, 64)

    # TODO(synk): Dropout(0.5) is identity at inference; training-mode RNG masking not implemented.

    # fc2 + sigmoid (lane-dense padded output; wrapper slices column 0)
    logits = jnp.dot(h, wf2_ref[...], preferred_element_type=jnp.float32) + bf2_ref[...]
    o_ref[...] = 1.0 / (1.0 + jnp.exp(-logits))                           # (TB, 128)


def _build_w1(W1, b1):
    """W1 (64,1,9), b1 (64,) -> (29, 1280) dense conv1 matrix and (1, 1280) bias.

    Column layout: col = half*640 + i*64 + oc, representing conv time t = 2*i + half.
    """
    w = W1[:, 0, :].T.astype(jnp.float32)                     # (9, 64) = [k, oc]
    blocks = []
    for half in range(2):
        for i in range(P):
            t = 2 * i + half
            blk = jnp.zeros((IN_SIZE, C1), jnp.float32).at[t:t + K, :].set(w)
            blocks.append(blk)
    w1cat = jnp.concatenate(blocks, axis=1)                   # (29, 1280)
    b1cat = jnp.tile(b1.astype(jnp.float32), 2 * P)[None, :]  # (1, 1280)
    return w1cat, b1cat


def _build_w2(W2, b2):
    """W2 (128,64,9), b2 (128,) -> (640, 256) dense conv2 matrix and (1, 256) bias.

    Row layout: r = i*64 + ic (pooled time i, in-channel ic).
    Column layout: c = t*128 + oc2.  Entry = W2[oc2, ic, i - t] for 0 <= i - t < 9, else 0.
    """
    w = jnp.transpose(W2, (2, 1, 0)).astype(jnp.float32)      # (9, 64, 128) = [k, ic, oc2]
    cols = []
    for t in range(L2):
        blk = jnp.zeros((P, C1, C2), jnp.float32).at[t:t + K, :, :].set(w)
        cols.append(blk.reshape(P * C1, C2))                  # (640, 128)
    w2big = jnp.concatenate(cols, axis=1)                     # (640, 256)
    b2big = jnp.tile(b2.astype(jnp.float32), L2)[None, :]     # (1, 256)
    return w2big, b2big


def _round_up(n, m):
    return ((n + m - 1) // m) * m


@jax.jit
def cnn_forward(x, params):
    """x: (B, 1, 29) float32 (NCW, C_in == 1).  Returns (B, 1) float32."""
    B = x.shape[0]
    x2 = x[:, 0, :].astype(jnp.float32)                       # (B, 29)

    W1, b1, W2, b2, Wf1, bf1, Wf2, bf2 = (params[k] for k in
        ("W1", "b1", "W2", "b2", "Wfc1", "bfc1", "Wfc2", "bfc2"))

    w1cat, b1cat = _build_w1(W1, b1)
    w2big, b2big = _build_w2(W2, b2)
    # fc1 with PyTorch flatten order (flat index = oc2*2 + t) folded in -> (256, 64)
    wf1perm = jnp.transpose(Wf1.reshape(H, C2, L2), (2, 1, 0)).reshape(C2 * L2, H)
    wf1perm = wf1perm.astype(jnp.float32)
    # fc2 padded to a lane-dense 128-wide output slab (only column 0 is real)
    wf2pad = jnp.zeros((H, OUT_PAD), jnp.float32).at[:, 0].set(Wf2[0].astype(jnp.float32))
    bf2pad = jnp.zeros((1, OUT_PAD), jnp.float32).at[0, 0].set(bf2[0].astype(jnp.float32))

    # Batch tiling: TB multiple of 8; amortize grid-step overhead at large B.
    TB = min(256, _round_up(B, 8))
    B_pad = _round_up(B, TB)
    if B_pad != B:
        x2 = jnp.pad(x2, ((0, B_pad - B), (0, 0)))

    const2 = lambda i: (0, 0)   # weights stay VMEM-resident across batch tiles
    out = pl.pallas_call(
        cnn_kernel,
        out_shape=jax.ShapeDtypeStruct((B_pad, OUT_PAD), jnp.float32),
        grid=(B_pad // TB,),
        in_specs=[
            pl.BlockSpec((TB, IN_SIZE), lambda i: (i, 0)),
            pl.BlockSpec((IN_SIZE, 2 * P * C1), const2),
            pl.BlockSpec((1, 2 * P * C1), const2),
            pl.BlockSpec((P * C1, L2 * C2), const2),
            pl.BlockSpec((1, L2 * C2), const2),
            pl.BlockSpec((C2 * L2, H), const2),
            pl.BlockSpec((1, H), const2),
            pl.BlockSpec((H, OUT_PAD), const2),
            pl.BlockSpec((1, OUT_PAD), const2),
        ],
        out_specs=pl.BlockSpec((TB, OUT_PAD), lambda i: (i, 0)),
        compiler_params=pltpu.CompilerParams(
            dimension_semantics=("parallel",)),
    )(x2, w1cat, b1cat, w2big, b2big, wf1perm,
      bf1.astype(jnp.float32)[None, :], wf2pad, bf2pad)

    return out[:B, :1]


def ref_forward(x, params):
    """Pure-JAX reference mirroring the PyTorch forward exactly (NCW layout)."""
    B = x.shape[0]
    W1, b1, W2, b2, Wf1, bf1, Wf2, bf2 = (params[k] for k in
        ("W1", "b1", "W2", "b2", "Wfc1", "bfc1", "Wfc2", "bfc2"))
    cols1 = jnp.stack([x[:, 0, t:t + K] for t in range(L1)], axis=1)      # (B,21,9)
    c1 = jax.nn.relu(jnp.einsum('btk,ok->bot', cols1, W1[:, 0, :])
                     + b1[None, :, None])                                 # (B,64,21)
    pool = jnp.max(c1[:, :, :2 * P].reshape(B, C1, P, 2), axis=-1)        # (B,64,10)
    cols2 = jnp.stack([pool[:, :, t:t + K] for t in range(L2)], axis=1)   # (B,2,64,9)
    c2 = jax.nn.relu(jnp.einsum('btik,oik->bot', cols2, W2)
                     + b2[None, :, None])                                 # (B,128,2)
    flat = c2.reshape(B, C2 * L2)                                         # (B,256)
    h = jax.nn.relu(flat @ Wf1.T + bf1)
    return jax.nn.sigmoid(h @ Wf2.T + bf2)


def init_params(key):
    def uni(k, shape, fan_in):
        bound = 1.0 / np.sqrt(fan_in)
        return jax.random.uniform(k, shape, jnp.float32, -bound, bound)
    ks = jax.random.split(key, 8)
    return {
        "W1":   uni(ks[0], (C1, 1, K), 1 * K),
        "b1":   uni(ks[1], (C1,), 1 * K),
        "W2":   uni(ks[2], (C2, C1, K), C1 * K),
        "b2":   uni(ks[3], (C2,), C1 * K),
        "Wfc1": uni(ks[4], (H, C2 * L2), C2 * L2),
        "bfc1": uni(ks[5], (H,), C2 * L2),
        "Wfc2": uni(ks[6], (1, H), H),
        "bfc2": uni(ks[7], (1,), H),
    }


if __name__ == "__main__":
    key = jax.random.PRNGKey(0)
    pkey, xkey = jax.random.split(key)
    params = init_params(pkey)

    B = 4
    x = jax.random.normal(xkey, (B, 1, IN_SIZE), jnp.float32)

    out = jax.block_until_ready(cnn_forward(x, params))
    ref = jax.block_until_ready(ref_forward(x, params))

    assert out.shape == (B, 1), out.shape
    if not jnp.allclose(out, ref, rtol=1e-4, atol=1e-5):
        raise AssertionError(f"mismatch:\nkernel={out}\nref={ref}")
    print("KERNEL_OK")
</pallas_src>

<mosaic_0001>
module attributes {stable_mosaic.version = 11 : i64} {
  func.func @cnn_kernel(%arg0: i32, %arg1: memref<8x29xf32, #tpu.memory_space<vmem>>, %arg2: memref<29x1280xf32, #tpu.memory_space<vmem>>, %arg3: memref<1x1280xf32, #tpu.memory_space<vmem>>, %arg4: memref<640x256xf32, #tpu.memory_space<vmem>>, %arg5: memref<1x256xf32, #tpu.memory_space<vmem>>, %arg6: memref<256x64xf32, #tpu.memory_space<vmem>>, %arg7: memref<1x64xf32, #tpu.memory_space<vmem>>, %arg8: memref<64x128xf32, #tpu.memory_space<vmem>>, %arg9: memref<1x128xf32, #tpu.memory_space<vmem>>, %arg10: memref<8x128xf32, #tpu.memory_space<vmem>>) attributes {dimension_semantics = [#tpu.dimension_semantics<parallel>], iteration_bounds = array<i64: 1>, scalar_prefetch = 0 : i64, scratch_operands = 0 : i64, tpu.core_type = #tpu.core_type<tc>, window_params = [{transform_indices = @transform_0, window_bounds = array<i64: 8, 29>}, {pipeline_mode = #tpu.pipeline_mode<synchronous>, transform_indices = @transform_1, window_bounds = array<i64: 29, 1280>}, {pipeline_mode = #tpu.pipeline_mode<synchronous>, transform_indices = @transform_2, window_bounds = array<i64: 1, 1280>}, {pipeline_mode = #tpu.pipeline_mode<synchronous>, transform_indices = @transform_3, window_bounds = array<i64: 640, 256>}, {pipeline_mode = #tpu.pipeline_mode<synchronous>, transform_indices = @transform_4, window_bounds = array<i64: 1, 256>}, {pipeline_mode = #tpu.pipeline_mode<synchronous>, transform_indices = @transform_5, window_bounds = array<i64: 256, 64>}, {pipeline_mode = #tpu.pipeline_mode<synchronous>, transform_indices = @transform_6, window_bounds = array<i64: 1, 64>}, {pipeline_mode = #tpu.pipeline_mode<synchronous>, transform_indices = @transform_7, window_bounds = array<i64: 64, 128>}, {pipeline_mode = #tpu.pipeline_mode<synchronous>, transform_indices = @transform_8, window_bounds = array<i64: 1, 128>}, {transform_indices = @transform_9, window_bounds = array<i64: 8, 128>}]} {
    %c0 = arith.constant 0 : index
    %c0_0 = arith.constant 0 : index
    %0 = vector.load %arg1[%c0, %c0_0] : memref<8x29xf32, #tpu.memory_space<vmem>>, vector<8x29xf32>
    %c0_1 = arith.constant 0 : index
    %c0_2 = arith.constant 0 : index
    %1 = vector.load %arg2[%c0_1, %c0_2] : memref<29x1280xf32, #tpu.memory_space<vmem>>, vector<29x1280xf32>
    %cst = arith.constant dense<0.000000e+00> : vector<8x1280xf32>
    %2 = tpu.matmul %0, %1, %cst {dimension_numbers = #tpu.dot_dimension_numbers<[1], [0], [0], [1], [0, 0, 1, 1], [], []>} : vector<8x29xf32>, vector<29x1280xf32>, vector<8x1280xf32> -> vector<8x1280xf32>
    %c0_3 = arith.constant 0 : index
    %c0_4 = arith.constant 0 : index
    %3 = vector.load %arg3[%c0_3, %c0_4] : memref<1x1280xf32, #tpu.memory_space<vmem>>, vector<1x1280xf32>
    %4 = vector.broadcast %3 : vector<1x1280xf32> to vector<8x1280xf32>
    %5 = arith.addf %2, %4 : vector<8x1280xf32>
    %cst_5 = arith.constant 0.000000e+00 : f32
    %6 = vector.broadcast %cst_5 : f32 to vector<8x1280xf32>
    %7 = arith.maximumf %5, %6 : vector<8x1280xf32>
    %8 = vector.extract_strided_slice %7 {offsets = [0, 0], sizes = [8, 640], strides = [1, 1]} : vector<8x1280xf32> to vector<8x640xf32>
    %9 = vector.extract_strided_slice %7 {offsets = [0, 640], sizes = [8, 640], strides = [1, 1]} : vector<8x1280xf32> to vector<8x640xf32>
    %10 = arith.maximumf %8, %9 : vector<8x640xf32>
    %c0_6 = arith.constant 0 : index
    %c0_7 = arith.constant 0 : index
    %11 = vector.load %arg4[%c0_6, %c0_7] : memref<640x256xf32, #tpu.memory_space<vmem>>, vector<640x256xf32>
    %cst_8 = arith.constant dense<0.000000e+00> : vector<8x256xf32>
    %12 = tpu.matmul %10, %11, %cst_8 {dimension_numbers = #tpu.dot_dimension_numbers<[1], [0], [0], [1], [0, 0, 1, 1], [], []>} : vector<8x640xf32>, vector<640x256xf32>, vector<8x256xf32> -> vector<8x256xf32>
    %c0_9 = arith.constant 0 : index
    %c0_10 = arith.constant 0 : index
    %13 = vector.load %arg5[%c0_9, %c0_10] : memref<1x256xf32, #tpu.memory_space<vmem>>, vector<1x256xf32>
    %14 = vector.broadcast %13 : vector<1x256xf32> to vector<8x256xf32>
    %15 = arith.addf %12, %14 : vector<8x256xf32>
    %cst_11 = arith.constant 0.000000e+00 : f32
    %16 = vector.broadcast %cst_11 : f32 to vector<8x256xf32>
    %17 = arith.maximumf %15, %16 : vector<8x256xf32>
    %c0_12 = arith.constant 0 : index
    %c0_13 = arith.constant 0 : index
    %18 = vector.load %arg6[%c0_12, %c0_13] : memref<256x64xf32, #tpu.memory_space<vmem>>, vector<256x64xf32>
    %cst_14 = arith.constant dense<0.000000e+00> : vector<8x64xf32>
    %19 = tpu.matmul %17, %18, %cst_14 {dimension_numbers = #tpu.dot_dimension_numbers<[1], [0], [0], [1], [0, 0, 1, 1], [], []>} : vector<8x256xf32>, vector<256x64xf32>, vector<8x64xf32> -> vector<8x64xf32>
    %c0_15 = arith.constant 0 : index
    %c0_16 = arith.constant 0 : index
    %20 = vector.load %arg7[%c0_15, %c0_16] : memref<1x64xf32, #tpu.memory_space<vmem>>, vector<1x64xf32>
    %21 = vector.broadcast %20 : vector<1x64xf32> to vector<8x64xf32>
    %22 = arith.addf %19, %21 : vector<8x64xf32>
    %cst_17 = arith.constant 0.000000e+00 : f32
    %23 = vector.broadcast %cst_17 : f32 to vector<8x64xf32>
    %24 = arith.maximumf %22, %23 : vector<8x64xf32>
    %c0_18 = arith.constant 0 : index
    %c0_19 = arith.constant 0 : index
    %25 = vector.load %arg8[%c0_18, %c0_19] : memref<64x128xf32, #tpu.memory_space<vmem>>, vector<64x128xf32>
    %cst_20 = arith.constant dense<0.000000e+00> : vector<8x128xf32>
    %26 = tpu.matmul %24, %25, %cst_20 {dimension_numbers = #tpu.dot_dimension_numbers<[1], [0], [0], [1], [0, 0, 1, 1], [], []>} : vector<8x64xf32>, vector<64x128xf32>, vector<8x128xf32> -> vector<8x128xf32>
    %c0_21 = arith.constant 0 : index
    %c0_22 = arith.constant 0 : index
    %27 = vector.load %arg9[%c0_21, %c0_22] : memref<1x128xf32, #tpu.memory_space<vmem>>, vector<1x128xf32>
    %28 = vector.broadcast %27 : vector<1x128xf32> to vector<8x128xf32>
    %29 = arith.addf %26, %28 : vector<8x128xf32>
    %cst_23 = arith.constant 0.000000e+00 : f32
    %30 = vector.broadcast %cst_23 : f32 to vector<8x128xf32>
    %31 = arith.subf %30, %29 : vector<8x128xf32>
    %32 = math.exp %31 : vector<8x128xf32>
    %cst_24 = arith.constant 1.000000e+00 : f32
    %33 = vector.broadcast %cst_24 : f32 to vector<8x128xf32>
    %34 = arith.addf %33, %32 : vector<8x128xf32>
    %cst_25 = arith.constant 1.000000e+00 : f32
    %35 = vector.broadcast %cst_25 : f32 to vector<8x128xf32>
    %36 = arith.divf %35, %34 : vector<8x128xf32>
    %c0_26 = arith.constant 0 : index
    %c0_27 = arith.constant 0 : index
    %37 = vector.load %arg10[%c0_26, %c0_27] : memref<8x128xf32, #tpu.memory_space<vmem>>, vector<8x128xf32>
    tpu.vector_store %arg10[%c0_26, %c0_27], %36 {strides = array<i32>} : memref<8x128xf32, #tpu.memory_space<vmem>>, vector<8x128xf32>,
    return
  }
  func.func @transform_0(%arg0: i32) -> (i32, i32) {
    %c0_i32 = arith.constant 0 : i32
    %c0_i32_0 = arith.constant 0 : i32
    return %arg0, %c0_i32 : i32, i32
  }
  func.func @transform_1(%arg0: i32) -> (i32, i32) {
    %c0_i32 = arith.constant 0 : i32
    %c0_i32_0 = arith.constant 0 : i32
    %c0_i32_1 = arith.constant 0 : i32
    return %c0_i32, %c0_i32_0 : i32, i32
  }
  func.func @transform_2(%arg0: i32) -> (i32, i32) {
    %c0_i32 = arith.constant 0 : i32
    %c0_i32_0 = arith.constant 0 : i32
    %c0_i32_1 = arith.constant 0 : i32
    return %c0_i32, %c0_i32_0 : i32, i32
  }
  func.func @transform_3(%arg0: i32) -> (i32, i32) {
    %c0_i32 = arith.constant 0 : i32
    %c0_i32_0 = arith.constant 0 : i32
    %c0_i32_1 = arith.constant 0 : i32
    return %c0_i32, %c0_i32_0 : i32, i32
  }
  func.func @transform_4(%arg0: i32) -> (i32, i32) {
    %c0_i32 = arith.constant 0 : i32
    %c0_i32_0 = arith.constant 0 : i32
    %c0_i32_1 = arith.constant 0 : i32
    return %c0_i32, %c0_i32_0 : i32, i32
  }
  func.func @transform_5(%arg0: i32) -> (i32, i32) {
    %c0_i32 = arith.constant 0 : i32
    %c0_i32_0 = arith.constant 0 : i32
    %c0_i32_1 = arith.constant 0 : i32
    return %c0_i32, %c0_i32_0 : i32, i32
  }
  func.func @transform_6(%arg0: i32) -> (i32, i32) {
    %c0_i32 = arith.constant 0 : i32
    %c0_i32_0 = arith.constant 0 : i32
    %c0_i32_1 = arith.constant 0 : i32
    return %c0_i32, %c0_i32_0 : i32, i32
  }
  func.func @transform_7(%arg0: i32) -> (i32, i32) {
    %c0_i32 = arith.constant 0 : i32
    %c0_i32_0 = arith.constant 0 : i32
    %c0_i32_1 = arith.constant 0 : i32
    return %c0_i32, %c0_i32_0 : i32, i32
  }
  func.func @transform_8(%arg0: i32) -> (i32, i32) {
    %c0_i32 = arith.constant 0 : i32
    %c0_i32_0 = arith.constant 0 : i32
    %c0_i32_1 = arith.constant 0 : i32
    return %c0_i32, %c0_i32_0 : i32, i32
  }
  func.func @transform_9(%arg0: i32) -> (i32, i32) {
    %c0_i32 = arith.constant 0 : i32
    %c0_i32_0 = arith.constant 0 : i32
    return %arg0, %c0_i32 : i32, i32
  }
}

</mosaic_0001>

<llo_original>
// kernel: tile.13
$region0: #{tile.13}
  #allocation0 [shape = 's32[1]{0}', space=sflag, size = 0x4, scoped, tag = 'scoped memory for tile.13']
  %s0 = inlined_call_operand.vmem [shape: f32[64], index: 0, kind: input, shape index: {}]
  %s1 = inlined_call_operand.vmem [shape: f32[20,64], index: 1, kind: output, shape index: {}]
  // Predicated region
  $region2: #{tile.13} parent=0 // pred_check
    _
  $region3: #{tile.13} parent=0 // pred_check_branch
    %3 = sbr.rel (0) target = $region5
  $region4: #{tile.13} parent=0 // pred_region
    _
  $region5: #{tile.13} parent=0 // pred_fallthru
    _
  %v4 = vld [vmem:[%s0] ss:$0 sm:$0xff]
  %5 = vst [vmem:[%s1] sm:$0xff] %v4
  %s6 = scalar_lea.vmem %s1, 8
  %7 = vst [vmem:[%s6] sm:$0xff] %v4
  %s8 = scalar_lea.vmem %s1, 16
  %9 = vst [vmem:[%s8] sm:$0xff] %v4

// kernel: tile.14
$region0: #{tile.14}
  %s0 = inlined_call_operand.vmem [shape: f32[20,64], index: 0, kind: input, shape index: {}]
  %s1 = inlined_call_operand.vmem [shape: f32[1,1280], index: 1, kind: output, shape index: {}]
  $region1: #{tile.14} parent=0
    #allocation0 [shape = 'u8[40960]{0}', space=vmem, size = 0xa000, scoped, tag = 'scoped mem for output reshape']
    %v2 = vld [vmem:[%s0] ss:$2 sm:$0xff]
    %vm3 = vcmask 523264
    %4 = vst.msk [vmem:[#allocation0] ss:$8 sm:$0xf] %vm3, %v2
    %5 = vst.msk [vmem:[#allocation0] ss:$8 sm:$0xf0] %vm3, %v2
    %s6 = scalar_lea.vmem %s0, 16
    %s7 = smov 3
    %v8 = vld [vmem:[%s6] ss:$2 sm:%s7]
    %vm9 = vcmask 523264
    %s10 = scalar_lea.vmem [#allocation0], 64
    %11 = vst.msk [vmem:[%s10] ss:$8 sm:$0x3] %vm9, %v8
    %s12 = scalar_lea.vmem %s0, 1
    %v13 = vld [vmem:[%s12] ss:$2 sm:$0xff]
    %14 = vrot.lane.b32.xlu0 %v13, 64
    %v15 = vpop.permute.xlu0 %14
    %vm16 = vcmask 1048064
    %17 = vst.msk [vmem:[#allocation0] ss:$8 sm:$0xf] %vm16, %v15
    %18 = vst.msk [vmem:[#allocation0] ss:$8 sm:$0xf0] %vm16, %v15
    %s19 = scalar_lea.vmem %s0, 17
    %s20 = smov 3
    %v21 = vld [vmem:[%s19] ss:$2 sm:%s20]
    %22 = vrot.lane.b32.xlu0 %v21, 64
    %v23 = vpop.permute.xlu0 %22
    %vm24 = vcmask 1048064
    %s25 = scalar_lea.vmem [#allocation0], 64
    %26 = vst.msk [vmem:[%s25] ss:$8 sm:$0x3] %vm24, %v23
    %s28 = sshll.u32 1, 1
    %s29 = ssub.s32 %s28, 1
    %v31 = vld [vmem:[#allocation0] sm:%s29]
    %s32 = sshll.u32 1, 1
    %s33 = ssub.s32 %s32, 1
    %34 = vst [vmem:[%s1] sm:%s33] %v31
    %s35 = scalar_lea.vmem [#allocation0], 8
    %v36 = vld [vmem:[%s35] sm:%s29]
    %s37 = sshll.u32 1, 1
    %s38 = ssub.s32 %s37, 1
    %s39 = scalar_lea.vmem %s1, 1
    %40 = vst [vmem:[%s39] sm:%s38] %v36
    %s41 = scalar_lea.vmem [#allocation0], 16
    %v42 = vld [vmem:[%s41] sm:%s29]
    %s43 = sshll.u32 1, 1
    %s44 = ssub.s32 %s43, 1
    %s45 = smul.addr 1, 2
    %s46 = scalar_lea.vmem %s1, %s45
    %47 = vst [vmem:[%s46] sm:%s44] %v42
    %s48 = scalar_lea.vmem [#allocation0], 24
    %v49 = vld [vmem:[%s48] sm:%s29]
    %s50 = sshll.u32 1, 1
    %s51 = ssub.s32 %s50, 1
    %s52 = smul.addr 1, 3
    %s53 = scalar_lea.vmem %s1, %s52
    %54 = vst [vmem:[%s53] sm:%s51] %v49
    %s55 = scalar_lea.vmem [#allocation0], 32
    %v56 = vld [vmem:[%s55] sm:%s29]
    %s57 = sshll.u32 1, 1
    %s58 = ssub.s32 %s57, 1
    %s59 = smul.addr 1, 4
    %s60 = scalar_lea.vmem %s1, %s59
    %61 = vst [vmem:[%s60] sm:%s58] %v56
    %s62 = scalar_lea.vmem [#allocation0], 40
    %v63 = vld [vmem:[%s62] sm:%s29]
    %s64 = sshll.u32 1, 1
    %s65 = ssub.s32 %s64, 1
    %s66 = smul.addr 1, 5
    %s67 = scalar_lea.vmem %s1, %s66
    %68 = vst [vmem:[%s67] sm:%s65] %v63
    %s69 = scalar_lea.vmem [#allocation0], 48
    %v70 = vld [vmem:[%s69] sm:%s29]
    %s71 = sshll.u32 1, 1
    %s72 = ssub.s32 %s71, 1
    %s73 = smul.addr 1, 6
    %s74 = scalar_lea.vmem %s1, %s73
    %75 = vst [vmem:[%s74] sm:%s72] %v70
    %s76 = scalar_lea.vmem [#allocation0], 56
    %v77 = vld [vmem:[%s76] sm:%s29]
    %s78 = sshll.u32 1, 1
    %s79 = ssub.s32 %s78, 1
    %s80 = smul.addr 1, 7
    %s81 = scalar_lea.vmem %s1, %s80
    %82 = vst [vmem:[%s81] sm:%s79] %v77
    %s83 = scalar_lea.vmem [#allocation0], 64
    %v84 = vld [vmem:[%s83] sm:%s29]
    %s85 = sshll.u32 1, 1
    %s86 = ssub.s32 %s85, 1
    %s87 = smul.addr 1, 8
    %s88 = scalar_lea.vmem %s1, %s87
    %89 = vst [vmem:[%s88] sm:%s86] %v84
    %s90 = scalar_lea.vmem [#allocation0], 72
    %v91 = vld [vmem:[%s90] sm:%s29]
    %s92 = sshll.u32 1, 1
    %s93 = ssub.s32 %s92, 1
    %s94 = smul.addr 1, 9
    %s95 = scalar_lea.vmem %s1, %s94
    %96 = vst [vmem:[%s95] sm:%s93] %v91

// kernel: tile.18
$region0: #{tile.18}
  #allocation0 [shape = 's32[1]{0}', space=sflag, size = 0x4, scoped, tag = 'scoped memory for tile.18']
  %s0 = inlined_call_operand.vmem [shape: f32[128], index: 0, kind: input, shape index: {}]
  %s1 = inlined_call_operand.vmem [shape: f32[2,128], index: 1, kind: output, shape index: {}]
  // Predicated region
  $region2: #{tile.18} parent=0 // pred_check
    _
  $region3: #{tile.18} parent=0 // pred_check_branch
    %3 = sbr.rel (0) target = $region5
  $region4: #{tile.18} parent=0 // pred_region
    _
  $region5: #{tile.18} parent=0 // pred_fallthru
    _
  %v4 = vld [vmem:[%s0] ss:$0 sm:$0xff]
  %5 = vst [vmem:[%s1] sm:$0x3] %v4

// kernel: cnn_forward.1
$region0: #{cnn_forward.1}
  #allocation0 [shape = 'u32[]', space=smem, size = 0x4, offset = 0x4, fixed_abs, tag = 'smem constant byte address 0x4 - core index']
  #allocation1 [shape = 'u32[144,128]{1,0:T(1,128)}', space=vmem, size = 0x12000, scoped, tag = 'internal scratch']
  %s0 = inlined_call_operand.vmem [shape: f32[8,29], index: 0, kind: input, shape index: {}]
  %s1 = inlined_call_operand.vmem [shape: f32[29,1280], index: 1, kind: input, shape index: {}]
  %s2 = inlined_call_operand.vmem [shape: f32[1,1280], index: 2, kind: input, shape index: {}]
  %s3 = inlined_call_operand.vmem [shape: f32[640,256], index: 3, kind: input, shape index: {}]
  %s4 = inlined_call_operand.vmem [shape: f32[1,256], index: 4, kind: input, shape index: {}]
  %s5 = inlined_call_operand.vmem [shape: f32[256,64], index: 5, kind: input, shape index: {}]
  %s6 = inlined_call_operand.vmem [shape: f32[1,64], index: 6, kind: input, shape index: {}]
  %s7 = inlined_call_operand.vmem [shape: f32[64,128], index: 7, kind: input, shape index: {}]
  %s8 = inlined_call_operand.vmem [shape: f32[1,128], index: 8, kind: input, shape index: {}]
  %s9 = inlined_call_operand.vmem [shape: f32[8,128], index: 9, kind: output, shape index: {}]
  %s10 = sld [smem:[#allocation0]]
  $region46: #{cnn_forward.1} parent=0
    _
  %s12 = ssub.s32 1, %s10
  %s13 = scalar_select 0, %s12, %s10
  // Predicated region
  $region2: #{cnn_forward.1} parent=0 // pred_check
    _
  $region3: #{cnn_forward.1} parent=0 // pred_check_branch
    %15 = sbr.rel (0) target = $region5
  $region4: #{cnn_forward.1} parent=0 // pred_region
    _
  $region5: #{cnn_forward.1} parent=0 // pred_fallthru
    _
  // Predicated region
  $region6: #{cnn_forward.1} parent=0 // pred_check
    _
  $region7: #{cnn_forward.1} parent=0 // pred_check_branch
    %17 = sbr.rel (0) target = $region9
  $region8: #{cnn_forward.1} parent=0 // pred_region
    _
  $region9: #{cnn_forward.1} parent=0 // pred_fallthru
    _
  // Predicated region
  $region10: #{cnn_forward.1} parent=0 // pred_check
    _
  $region11: #{cnn_forward.1} parent=0 // pred_check_branch
    %19 = sbr.rel (0) target = $region13
  $region12: #{cnn_forward.1} parent=0 // pred_region
    _
  $region13: #{cnn_forward.1} parent=0 // pred_fallthru
    _
  // Predicated region
  $region14: #{cnn_forward.1} parent=0 // pred_check
    _
  $region15: #{cnn_forward.1} parent=0 // pred_check_branch
    %21 = sbr.rel (0) target = $region17
  $region16: #{cnn_forward.1} parent=0 // pred_region
    _
  $region17: #{cnn_forward.1} parent=0 // pred_fallthru
    _
  // Predicated region
  $region18: #{cnn_forward.1} parent=0 // pred_check
    _
  $region19: #{cnn_forward.1} parent=0 // pred_check_branch
    %23 = sbr.rel (0) target = $region21
  $region20: #{cnn_forward.1} parent=0 // pred_region
    _
  $region21: #{cnn_forward.1} parent=0 // pred_fallthru
    _
  // Predicated region
  $region22: #{cnn_forward.1} parent=0 // pred_check
    _
  $region23: #{cnn_forward.1} parent=0 // pred_check_branch
    %25 = sbr.rel (0) target = $region25
  $region24: #{cnn_forward.1} parent=0 // pred_region
    _
  $region25: #{cnn_forward.1} parent=0 // pred_fallthru
    _
  // Predicated region
  $region26: #{cnn_forward.1} parent=0 // pred_check
    _
  $region27: #{cnn_forward.1} parent=0 // pred_check_branch
    %27 = sbr.rel (0) target = $region29
  $region28: #{cnn_forward.1} parent=0 // pred_region
    _
  $region29: #{cnn_forward.1} parent=0 // pred_fallthru
    _
  // Predicated region
  $region30: #{cnn_forward.1} parent=0 // pred_check
    _
  $region31: #{cnn_forward.1} parent=0 // pred_check_branch
    %29 = sbr.rel (0) target = $region33
  $region32: #{cnn_forward.1} parent=0 // pred_region
    _
  $region33: #{cnn_forward.1} parent=0 // pred_fallthru
    _
  // Predicated region
  $region34: #{cnn_forward.1} parent=0 // pred_check
    _
  $region35: #{cnn_forward.1} parent=0 // pred_check_branch
    %31 = sbr.rel (0) target = $region37
  $region36: #{cnn_forward.1} parent=0 // pred_region
    _
  $region37: #{cnn_forward.1} parent=0 // pred_fallthru
    _
  %v32 = vld [vmem:[%s0] sm:$0xff]
  %v33 = vld [vmem:[%s1] sm:$0xff]
  %v34 = vld [vmem:[%s1 + $0x8] sm:$0xff]
  %v35 = vld [vmem:[%s1 + $0x10] sm:$0xff]
  %v36 = vld [vmem:[%s1 + $0x18] sm:$0xff]
  %v37 = vld [vmem:[%s1 + $0x20] sm:$0xff]
  %v38 = vld [vmem:[%s1 + $0x28] sm:$0xff]
  %v39 = vld [vmem:[%s1 + $0x30] sm:$0xff]
  %v40 = vld [vmem:[%s1 + $0x38] sm:$0xff]
  %v41 = vld [vmem:[%s1 + $0x40] sm:$0xff]
  %v42 = vld [vmem:[%s1 + $0x48] sm:$0xff]
  %v43 = vld [vmem:[%s1 + $0x50] sm:$0xff]
  %v44 = vld [vmem:[%s1 + $0x58] sm:$0xff]
  %v45 = vld [vmem:[%s1 + $0x60] sm:$0xff]
  %v46 = vld [vmem:[%s1 + $0x68] sm:$0xff]
  %v47 = vld [vmem:[%s1 + $0x70] sm:$0xff]
  %v48 = vld [vmem:[%s1 + $0x78] sm:$0xff]
  %v49 = vld [vmem:[%s1 + $0x80] sm:$0xff]
  %v50 = vld [vmem:[%s1 + $0x88] sm:$0xff]
  %v51 = vld [vmem:[%s1 + $0x90] sm:$0xff]
  %v52 = vld [vmem:[%s1 + $0x98] sm:$0xff]
  %v53 = vld [vmem:[%s1 + $0xa0] sm:$0xff]
  %v54 = vld [vmem:[%s1 + $0xa8] sm:$0xff]
  %v55 = vld [vmem:[%s1 + $0xb0] sm:$0xff]
  %v56 = vld [vmem:[%s1 + $0xb8] sm:$0xff]
  %v57 = vld [vmem:[%s1 + $0xc0] sm:$0xff]
  %v58 = vld [vmem:[%s1 + $0xc8] sm:$0xff]
  %v59 = vld [vmem:[%s1 + $0xd0] sm:$0xff]
  %v60 = vld [vmem:[%s1 + $0xd8] sm:$0xff]
  %v61 = vld [vmem:[%s1 + $0xe0] sm:$0xff]
  %v62 = vld [vmem:[%s1 + $0xe8] sm:$0xff]
  %v63 = vld [vmem:[%s1 + $0xf0] sm:$0x1f]
  %v64 = vld [vmem:[%s1 + $0xf8] sm:$0x1f]
  %v65 = vld [vmem:[%s1 + $0x100] sm:$0x1f]
  %v66 = vld [vmem:[%s1 + $0x108] sm:$0x1f]
  %v67 = vld [vmem:[%s1 + $0x110] sm:$0x1f]
  %v68 = vld [vmem:[%s1 + $0x118] sm:$0x1f]
  %v69 = vld [vmem:[%s1 + $0x120] sm:$0x1f]
  %v70 = vld [vmem:[%s1 + $0x128] sm:$0x1f]
  %v71 = vld [vmem:[%s1 + $0x130] sm:$0x1f]
  %v72 = vld [vmem:[%s1 + $0x138] sm:$0x1f]
  %v73 = vld [vmem:[%s2] sm:$0xff]
  %v74 = vld [vmem:[%s2 + $0x8] sm:$0x3]
  %v77 = vlaneseq
  %v78 = vshrl.u32 %v77, 7
  %v79 = vsub.s32 0, %v78
  %v80 = vrot.slane %v73, %v79
  %v81 = vlaneseq
  %v82 = vshrl.u32 %v81, 7
  %v83 = vsub.s32 1, %v82
  %v84 = vrot.slane %v73, %v83
  %v85 = vlaneseq
  %v86 = vshrl.u32 %v85, 7
  %v87 = vsub.s32 2, %v86
  %v88 = vrot.slane %v73, %v87
  %v89 = vlaneseq
  %v90 = vshrl.u32 %v89, 7
  %v91 = vsub.s32 3, %v90
  %v92 = vrot.slane %v73, %v91
  %v93 = vlaneseq
  %v94 = vshrl.u32 %v93, 7
  %v95 = vsub.s32 4, %v94
  %v96 = vrot.slane %v73, %v95
  %v97 = vlaneseq
  %v98 = vshrl.u32 %v97, 7
  %v99 = vsub.s32 5, %v98
  %v100 = vrot.slane %v73, %v99
  %v101 = vlaneseq
  %v102 = vshrl.u32 %v101, 7
  %v103 = vsub.s32 6, %v102
  %v104 = vrot.slane %v73, %v103
  %v105 = vlaneseq
  %v106 = vshrl.u32 %v105, 7
  %v107 = vsub.s32 7, %v106
  %v108 = vrot.slane %v73, %v107
  %v109 = vlaneseq
  %v110 = vshrl.u32 %v109, 7
  %v111 = vsub.s32 0, %v110
  %v112 = vrot.slane %v74, %v111
  %v113 = vlaneseq
  %v114 = vshrl.u32 %v113, 7
  %v115 = vsub.s32 1, %v114
  %v116 = vrot.slane %v74, %v115
  %vm127 = vcmask 236544
  %v129 = vsel %vm127, %v32, 0
  %vm131 = vcmask 1044480
  %v133 = vsel %vm131, %v63, 0
  %v136 = vsel %vm131, %v64, 0
  %v139 = vsel %vm131, %v65, 0
  %v142 = vsel %vm131, %v66, 0
  %v145 = vsel %vm131, %v67, 0
  %v148 = vsel %vm131, %v68, 0
  %v151 = vsel %vm131, %v69, 0
  %v154 = vsel %vm131, %v70, 0
  %v157 = vsel %vm131, %v71, 0
  %v160 = vsel %vm131, %v72, 0
  %162 = vmatprep.subr.mxu0 0.0
  %163 = vmatpush1.msra.mxu0 0.0
  %164 = vmatprep.subr.mxu0 0.0
  %165 = vmatpush1.msra.mxu0 0.0
  %166 = vmatprep.subr.mxu0 0.0
  %167 = vmatpush1.msra.mxu0 0.0
  %168 = vmatprep.subr.mxu0 0.0
  %169 = vmatpush1.msra.mxu0 0.0
  %170 = vmatprep.subr.mxu0 0.0
  %171 = vmatpush1.msra.mxu0 0.0
  %172 = vmatprep.subr.mxu0 0.0
  %173 = vmatpush1.msra.mxu0 0.0
  %174 = vmatprep.subr.mxu0 0.0
  %175 = vmatpush1.msra.mxu0 0.0
  %176 = vmatprep.subr.mxu0 0.0
  %177 = vmatpush1.msra.mxu0 0.0
  %178 = vmatprep.subr.mxu0 0.0
  %179 = vmatpush1.msra.mxu0 0.0
  %180 = vmatprep.subr.mxu0 0.0
  %181 = vmatpush1.msra.mxu0 0.0
  %182 = vmatprep.subr.mxu0 0.0
  %183 = vmatpush1.msra.mxu0 0.0
  %184 = vmatprep.subr.mxu0 0.0
  %185 = vmatpush1.msra.mxu0 0.0
  %186 = vmatprep.subr.mxu0 %v136
  %187 = vmatpush1.msra.mxu0 %v133
  %188 = vmatprep.subr.mxu0 %v54
  %189 = vmatpush1.msra.mxu0 %v53
  %190 = vmatprep.subr.mxu0 %v44
  %191 = vmatpush1.msra.mxu0 %v43
  %192 = vmatprep.subr.mxu0 %v34
  %193 = vmatpush1.msra.mxu0 %v33
  %194 = vmatprep.subr.mxu0 0.0
  %195 = vmatpush2.msra.mxu0 0.0
  %196 = vmatprep.subr.mxu0 0.0
  %197 = vmatpush2.msra.mxu0 0.0
  %198 = vmatprep.subr.mxu0 0.0
  %199 = vmatpush2.msra.mxu0 0.0
  %200 = vmatprep.subr.mxu0 0.0
  %201 = vmatpush2.msra.mxu0 0.0
  %202 = vmatprep.subr.mxu0 0.0
  %203 = vmatpush2.msra.mxu0 0.0
  %204 = vmatprep.subr.mxu0 0.0
  %205 = vmatpush2.msra.mxu0 0.0
  %206 = vmatprep.subr.mxu0 0.0
  %207 = vmatpush2.msra.mxu0 0.0
  %208 = vmatprep.subr.mxu0 0.0
  %209 = vmatpush2.msra.mxu0 0.0
  %210 = vmatprep.subr.mxu0 0.0
  %211 = vmatpush2.msra.mxu0 0.0
  %212 = vmatprep.subr.mxu0 0.0
  %213 = vmatpush2.msra.mxu0 0.0
  %214 = vmatprep.subr.mxu0 0.0
  %215 = vmatpush2.msra.mxu0 0.0
  %216 = vmatprep.subr.mxu0 0.0
  %217 = vmatpush2.msra.mxu0 0.0
  %218 = vmatprep.subr.mxu0 0.0
  %219 = vmatpush2.msra.mxu0 0.0
  %220 = vmatprep.subr.mxu0 0.0
  %221 = vmatpush2.msra.mxu0 0.0
  %222 = vmatprep.subr.mxu0 0.0
  %223 = vmatpush2.msra.mxu0 0.0
  %224 = vmatprep.subr.mxu0 0.0
  %225 = vmatpush2.msra.mxu0 0.0
  %226 = vmatprep.mubr.f32.mxu0 0.0
  %227 = vmatmul.mubr.f32.gmra.mxu0 %v129
  %v228 = vpop.f32.mrf.mxu0
  %v229 = vadd.f32 %v80, %v228
  %v230 = vpop.f32.mrf.mxu0
  %v231 = vadd.f32 %v84, %v230
  %232 = vdwg.mxu0
  %233 = vmatprep.subr.mxu0 0.0
  %234 = vmatpush1.msra.mxu0 0.0
  %235 = vmatprep.subr.mxu0 0.0
  %236 = vmatpush1.msra.mxu0 0.0
  %237 = vmatprep.subr.mxu0 0.0
  %238 = vmatpush1.msra.mxu0 0.0
  %239 = vmatprep.subr.mxu0 0.0
  %240 = vmatpush1.msra.mxu0 0.0
  %241 = vmatprep.subr.mxu0 0.0
  %242 = vmatpush1.msra.mxu0 0.0
  %243 = vmatprep.subr.mxu0 0.0
  %244 = vmatpush1.msra.mxu0 0.0
  %245 = vmatprep.subr.mxu0 0.0
  %246 = vmatpush1.msra.mxu0 0.0
  %247 = vmatprep.subr.mxu0 0.0
  %248 = vmatpush1.msra.mxu0 0.0
  %249 = vmatprep.subr.mxu0 0.0
  %250 = vmatpush1.msra.mxu0 0.0
  %251 = vmatprep.subr.mxu0 0.0
  %252 = vmatpush1.msra.mxu0 0.0
  %253 = vmatprep.subr.mxu0 0.0
  %254 = vmatpush1.msra.mxu0 0.0
  %255 = vmatprep.subr.mxu0 0.0
  %256 = vmatpush1.msra.mxu0 0.0
  %257 = vmatprep.subr.mxu0 %v142
  %258 = vmatpush1.msra.mxu0 %v139
  %259 = vmatprep.subr.mxu0 %v56
  %260 = vmatpush1.msra.mxu0 %v55
  %261 = vmatprep.subr.mxu0 %v46
  %262 = vmatpush1.msra.mxu0 %v45
  %263 = vmatprep.subr.mxu0 %v36
  %264 = vmatpush1.msra.mxu0 %v35
  %265 = vmatprep.subr.mxu0 0.0
  %266 = vmatpush2.msra.mxu0 0.0
  %267 = vmatprep.subr.mxu0 0.0
  %268 = vmatpush2.msra.mxu0 0.0
  %269 = vmatprep.subr.mxu0 0.0
  %270 = vmatpush2.msra.mxu0 0.0
  %271 = vmatprep.subr.mxu0 0.0
  %272 = vmatpush2.msra.mxu0 0.0
  %273 = vmatprep.subr.mxu0 0.0
  %274 = vmatpush2.msra.mxu0 0.0
  %275 = vmatprep.subr.mxu0 0.0
  %276 = vmatpush2.msra.mxu0 0.0
  %277 = vmatprep.subr.mxu0 0.0
  %278 = vmatpush2.msra.mxu0 0.0
  %279 = vmatprep.subr.mxu0 0.0
  %280 = vmatpush2.msra.mxu0 0.0
  %281 = vmatprep.subr.mxu0 0.0
  %282 = vmatpush2.msra.mxu0 0.0
  %283 = vmatprep.subr.mxu0 0.0
  %284 = vmatpush2.msra.mxu0 0.0
  %285 = vmatprep.subr.mxu0 0.0
  %286 = vmatpush2.msra.mxu0 0.0
  %287 = vmatprep.subr.mxu0 0.0
  %288 = vmatpush2.msra.mxu0 0.0
  %289 = vmatprep.subr.mxu0 0.0
  %290 = vmatpush2.msra.mxu0 0.0
  %291 = vmatprep.subr.mxu0 0.0
  %292 = vmatpush2.msra.mxu0 0.0
  %293 = vmatprep.subr.mxu0 0.0
  %294 = vmatpush2.msra.mxu0 0.0
  %295 = vmatprep.subr.mxu0 0.0
  %296 = vmatpush2.msra.mxu0 0.0
  %297 = vmatprep.mubr.f32.mxu0 0.0
  %298 = vmatmul.mubr.f32.gmra.mxu0 %v129
  %v299 = vpop.f32.mrf.mxu0
  %v300 = vadd.f32 %v88, %v299
  %v301 = vpop.f32.mrf.mxu0
  %v302 = vadd.f32 %v92, %v301
  %303 = vdwg.mxu0
  %304 = vmatprep.subr.mxu0 0.0
  %305 = vmatpush1.msra.mxu0 0.0
  %306 = vmatprep.subr.mxu0 0.0
  %307 = vmatpush1.msra.mxu0 0.0
  %308 = vmatprep.subr.mxu0 0.0
  %309 = vmatpush1.msra.mxu0 0.0
  %310 = vmatprep.subr.mxu0 0.0
  %311 = vmatpush1.msra.mxu0 0.0
  %312 = vmatprep.subr.mxu0 0.0
  %313 = vmatpush1.msra.mxu0 0.0
  %314 = vmatprep.subr.mxu0 0.0
  %315 = vmatpush1.msra.mxu0 0.0
  %316 = vmatprep.subr.mxu0 0.0
  %317 = vmatpush1.msra.mxu0 0.0
  %318 = vmatprep.subr.mxu0 0.0
  %319 = vmatpush1.msra.mxu0 0.0
  %320 = vmatprep.subr.mxu0 0.0
  %321 = vmatpush1.msra.mxu0 0.0
  %322 = vmatprep.subr.mxu0 0.0
  %323 = vmatpush1.msra.mxu0 0.0
  %324 = vmatprep.subr.mxu0 0.0
  %325 = vmatpush1.msra.mxu0 0.0
  %326 = vmatprep.subr.mxu0 0.0
  %327 = vmatpush1.msra.mxu0 0.0
  %328 = vmatprep.subr.mxu0 %v148
  %329 = vmatpush1.msra.mxu0 %v145
  %330 = vmatprep.subr.mxu0 %v58
  %331 = vmatpush1.msra.mxu0 %v57
  %332 = vmatprep.subr.mxu0 %v48
  %333 = vmatpush1.msra.mxu0 %v47
  %334 = vmatprep.subr.mxu0 %v38
  %335 = vmatpush1.msra.mxu0 %v37
  %336 = vmatprep.subr.mxu0 0.0
  %337 = vmatpush2.msra.mxu0 0.0
  %338 = vmatprep.subr.mxu0 0.0
  %339 = vmatpush2.msra.mxu0 0.0
  %340 = vmatprep.subr.mxu0 0.0
  %341 = vmatpush2.msra.mxu0 0.0
  %342 = vmatprep.subr.mxu0 0.0
  %343 = vmatpush2.msra.mxu0 0.0
  %344 = vmatprep.subr.mxu0 0.0
  %345 = vmatpush2.msra.mxu0 0.0
  %346 = vmatprep.subr.mxu0 0.0
  %347 = vmatpush2.msra.mxu0 0.0
  %348 = vmatprep.subr.mxu0 0.0
  %349 = vmatpush2.msra.mxu0 0.0
  %350 = vmatprep.subr.mxu0 0.0
  %351 = vmatpush2.msra.mxu0 0.0
  %352 = vmatprep.subr.mxu0 0.0
  %353 = vmatpush2.msra.mxu0 0.0
  %354 = vmatprep.subr.mxu0 0.0
  %355 = vmatpush2.msra.mxu0 0.0
  %356 = vmatprep.subr.mxu0 0.0
  %357 = vmatpush2.msra.mxu0 0.0
  %358 = vmatprep.subr.mxu0 0.0
  %359 = vmatpush2.msra.mxu0 0.0
  %360 = vmatprep.subr.mxu0 0.0
  %361 = vmatpush2.msra.mxu0 0.0
  %362 = vmatprep.subr.mxu0 0.0
  %363 = vmatpush2.msra.mxu0 0.0
  %364 = vmatprep.subr.mxu0 0.0
  %365 = vmatpush2.msra.mxu0 0.0
  %366 = vmatprep.subr.mxu0 0.0
  %367 = vmatpush2.msra.mxu0 0.0
  %368 = vmatprep.mubr.f32.mxu0 0.0
  %369 = vmatmul.mubr.f32.gmra.mxu0 %v129
  %v370 = vpop.f32.mrf.mxu0
  %v371 = vadd.f32 %v96, %v370
  %v372 = vpop.f32.mrf.mxu0
  %v373 = vadd.f32 %v100, %v372
  %374 = vdwg.mxu0
  %375 = vmatprep.subr.mxu0 0.0
  %376 = vmatpush1.msra.mxu0 0.0
  %377 = vmatprep.subr.mxu0 0.0
  %378 = vmatpush1.msra.mxu0 0.0
  %379 = vmatprep.subr.mxu0 0.0
  %380 = vmatpush1.msra.mxu0 0.0
  %381 = vmatprep.subr.mxu0 0.0
  %382 = vmatpush1.msra.mxu0 0.0
  %383 = vmatprep.subr.mxu0 0.0
  %384 = vmatpush1.msra.mxu0 0.0
  %385 = vmatprep.subr.mxu0 0.0
  %386 = vmatpush1.msra.mxu0 0.0
  %387 = vmatprep.subr.mxu0 0.0
  %388 = vmatpush1.msra.mxu0 0.0
  %389 = vmatprep.subr.mxu0 0.0
  %390 = vmatpush1.msra.mxu0 0.0
  %391 = vmatprep.subr.mxu0 0.0
  %392 = vmatpush1.msra.mxu0 0.0
  %393 = vmatprep.subr.mxu0 0.0
  %394 = vmatpush1.msra.mxu0 0.0
  %395 = vmatprep.subr.mxu0 0.0
  %396 = vmatpush1.msra.mxu0 0.0
  %397 = vmatprep.subr.mxu0 0.0
  %398 = vmatpush1.msra.mxu0 0.0
  %399 = vmatprep.subr.mxu0 %v154
  %400 = vmatpush1.msra.mxu0 %v151
  %401 = vmatprep.subr.mxu0 %v60
  %402 = vmatpush1.msra.mxu0 %v59
  %403 = vmatprep.subr.mxu0 %v50
  %404 = vmatpush1.msra.mxu0 %v49
  %405 = vmatprep.subr.mxu0 %v40
  %406 = vmatpush1.msra.mxu0 %v39
  %407 = vmatprep.subr.mxu0 0.0
  %408 = vmatpush2.msra.mxu0 0.0
  %409 = vmatprep.subr.mxu0 0.0
  %410 = vmatpush2.msra.mxu0 0.0
  %411 = vmatprep.subr.mxu0 0.0
  %412 = vmatpush2.msra.mxu0 0.0
  %413 = vmatprep.subr.mxu0 0.0
  %414 = vmatpush2.msra.mxu0 0.0
  %415 = vmatprep.subr.mxu0 0.0
  %416 = vmatpush2.msra.mxu0 0.0
  %417 = vmatprep.subr.mxu0 0.0
  %418 = vmatpush2.msra.mxu0 0.0
  %419 = vmatprep.subr.mxu0 0.0
  %420 = vmatpush2.msra.mxu0 0.0
  %421 = vmatprep.subr.mxu0 0.0
  %422 = vmatpush2.msra.mxu0 0.0
  %423 = vmatprep.subr.mxu0 0.0
  %424 = vmatpush2.msra.mxu0 0.0
  %425 = vmatprep.subr.mxu0 0.0
  %426 = vmatpush2.msra.mxu0 0.0
  %427 = vmatprep.subr.mxu0 0.0
  %428 = vmatpush2.msra.mxu0 0.0
  %429 = vmatprep.subr.mxu0 0.0
  %430 = vmatpush2.msra.mxu0 0.0
  %431 = vmatprep.subr.mxu0 0.0
  %432 = vmatpush2.msra.mxu0 0.0
  %433 = vmatprep.subr.mxu0 0.0
  %434 = vmatpush2.msra.mxu0 0.0
  %435 = vmatprep.subr.mxu0 0.0
  %436 = vmatpush2.msra.mxu0 0.0
  %437 = vmatprep.subr.mxu0 0.0
  %438 = vmatpush2.msra.mxu0 0.0
  %439 = vmatprep.mubr.f32.mxu0 0.0
  %440 = vmatmul.mubr.f32.gmra.mxu0 %v129
  %v441 = vpop.f32.mrf.mxu0
  %v442 = vadd.f32 %v104, %v441
  %v443 = vpop.f32.mrf.mxu0
  %v444 = vadd.f32 %v108, %v443
  %445 = vdwg.mxu0
  %446 = vmatprep.subr.mxu0 0.0
  %447 = vmatpush1.msra.mxu0 0.0
  %448 = vmatprep.subr.mxu0 0.0
  %449 = vmatpush1.msra.mxu0 0.0
  %450 = vmatprep.subr.mxu0 0.0
  %451 = vmatpush1.msra.mxu0 0.0
  %452 = vmatprep.subr.mxu0 0.0
  %453 = vmatpush1.msra.mxu0 0.0
  %454 = vmatprep.subr.mxu0 0.0
  %455 = vmatpush1.msra.mxu0 0.0
  %456 = vmatprep.subr.mxu0 0.0
  %457 = vmatpush1.msra.mxu0 0.0
  %458 = vmatprep.subr.mxu0 0.0
  %459 = vmatpush1.msra.mxu0 0.0
  %460 = vmatprep.subr.mxu0 0.0
  %461 = vmatpush1.msra.mxu0 0.0
  %462 = vmatprep.subr.mxu0 0.0
  %463 = vmatpush1.msra.mxu0 0.0
  %464 = vmatprep.subr.mxu0 0.0
  %465 = vmatpush1.msra.mxu0 0.0
  %466 = vmatprep.subr.mxu0 0.0
  %467 = vmatpush1.msra.mxu0 0.0
  %468 = vmatprep.subr.mxu0 0.0
  %469 = vmatpush1.msra.mxu0 0.0
  %470 = vmatprep.subr.mxu0 %v160
  %471 = vmatpush1.msra.mxu0 %v157
  %472 = vmatprep.subr.mxu0 %v62
  %473 = vmatpush1.msra.mxu0 %v61
  %474 = vmatprep.subr.mxu0 %v52
  %475 = vmatpush1.msra.mxu0 %v51
  %476 = vmatprep.subr.mxu0 %v42
  %477 = vmatpush1.msra.mxu0 %v41
  %478 = vmatprep.subr.mxu0 0.0
  %479 = vmatpush2.msra.mxu0 0.0
  %480 = vmatprep.subr.mxu0 0.0
  %481 = vmatpush2.msra.mxu0 0.0
  %482 = vmatprep.subr.mxu0 0.0
  %483 = vmatpush2.msra.mxu0 0.0
  %484 = vmatprep.subr.mxu0 0.0
  %485 = vmatpush2.msra.mxu0 0.0
  %486 = vmatprep.subr.mxu0 0.0
  %487 = vmatpush2.msra.mxu0 0.0
  %488 = vmatprep.subr.mxu0 0.0
  %489 = vmatpush2.msra.mxu0 0.0
  %490 = vmatprep.subr.mxu0 0.0
  %491 = vmatpush2.msra.mxu0 0.0
  %492 = vmatprep.subr.mxu0 0.0
  %493 = vmatpush2.msra.mxu0 0.0
  %494 = vmatprep.subr.mxu0 0.0
  %495 = vmatpush2.msra.mxu0 0.0
  %496 = vmatprep.subr.mxu0 0.0
  %497 = vmatpush2.msra.mxu0 0.0
  %498 = vmatprep.subr.mxu0 0.0
  %499 = vmatpush2.msra.mxu0 0.0
  %500 = vmatprep.subr.mxu0 0.0
  %501 = vmatpush2.msra.mxu0 0.0
  %502 = vmatprep.subr.mxu0 0.0
  %503 = vmatpush2.msra.mxu0 0.0
  %504 = vmatprep.subr.mxu0 0.0
  %505 = vmatpush2.msra.mxu0 0.0
  %506 = vmatprep.subr.mxu0 0.0
  %507 = vmatpush2.msra.mxu0 0.0
  %508 = vmatprep.subr.mxu0 0.0
  %509 = vmatpush2.msra.mxu0 0.0
  %510 = vmatprep.mubr.f32.mxu0 0.0
  %511 = vmatmul.mubr.f32.gmra.mxu0 %v129
  %v512 = vpop.f32.mrf.mxu0
  %v513 = vadd.f32 %v112, %v512
  %v514 = vpop.f32.mrf.mxu0
  %v515 = vadd.f32 %v116, %v514
  %516 = vdwg.mxu0
  %v517 = vmax.f32 %v229, 0.0
  %v518 = vmax.f32 %v231, 0.0
  %v519 = vmax.f32 %v300, 0.0
  %v520 = vmax.f32 %v302, 0.0
  %v521 = vmax.f32 %v371, 0.0
  %v522 = vmax.f32 %v373, 0.0
  %v523 = vmax.f32 %v442, 0.0
  %v524 = vmax.f32 %v444, 0.0
  %v525 = vmax.f32 %v513, 0.0
  %v526 = vmax.f32 %v515, 0.0
  %v527 = vmax.f32 %v517, %v522
  %v528 = vmax.f32 %v518, %v523
  %v529 = vmax.f32 %v519, %v524
  %v530 = vmax.f32 %v520, %v525
  %v531 = vmax.f32 %v521, %v526
  %v532 = vld [vmem:[%s3] sm:$0xff]
  %v533 = vld [vmem:[%s3 + $0x8] sm:$0xff]
  %v534 = vld [vmem:[%s3 + $0x10] sm:$0xff]
  %v535 = vld [vmem:[%s3 + $0x18] sm:$0xff]
  %v536 = vld [vmem:[%s3 + $0x20] sm:$0xff]
  %v537 = vld [vmem:[%s3 + $0x28] sm:$0xff]
  %v538 = vld [vmem:[%s3 + $0x30] sm:$0xff]
  %v539 = vld [vmem:[%s3 + $0x38] sm:$0xff]
  %v540 = vld [vmem:[%s3 + $0x40] sm:$0xff]
  %v541 = vld [vmem:[%s3 + $0x48] sm:$0xff]
  %v542 = vld [vmem:[%s3 + $0x50] sm:$0xff]
  %v543 = vld [vmem:[%s3 + $0x58] sm:$0xff]
  %v544 = vld [vmem:[%s3 + $0x60] sm:$0xff]
  %v545 = vld [vmem:[%s3 + $0x68] sm:$0xff]
  %v546 = vld [vmem:[%s3 + $0x70] sm:$0xff]
  %v547 = vld [vmem:[%s3 + $0x78] sm:$0xff]
  %v548 = vld [vmem:[%s3 + $0x80] sm:$0xff]
  %v549 = vld [vmem:[%s3 + $0x88] sm:$0xff]
  %v550 = vld [vmem:[%s3 + $0x90] sm:$0xff]
  %v551 = vld [vmem:[%s3 + $0x98] sm:$0xff]
  %v552 = vld [vmem:[%s3 + $0xa0] sm:$0xff]
  %v553 = vld [vmem:[%s3 + $0xa8] sm:$0xff]
  %v554 = vld [vmem:[%s3 + $0xb0] sm:$0xff]
  %v555 = vld [vmem:[%s3 + $0xb8] sm:$0xff]
  %v556 = vld [vmem:[%s3 + $0xc0] sm:$0xff]
  %v557 = vld [vmem:[%s3 + $0xc8] sm:$0xff]
  %v558 = vld [vmem:[%s3 + $0xd0] sm:$0xff]
  %v559 = vld [vmem:[%s3 + $0xd8] sm:$0xff]
  %v560 = vld [vmem:[%s3 + $0xe0] sm:$0xff]
  %v561 = vld [vmem:[%s3 + $0xe8] sm:$0xff]
  %v562 = vld [vmem:[%s3 + $0xf0] sm:$0xff]
  %v563 = vld [vmem:[%s3 + $0xf8] sm:$0xff]
  %v564 = vld [vmem:[%s3 + $0x100] sm:$0xff]
  %v565 = vld [vmem:[%s3 + $0x108] sm:$0xff]
  %v566 = vld [vmem:[%s3 + $0x110] sm:$0xff]
  %v567 = vld [vmem:[%s3 + $0x118] sm:$0xff]
  %v568 = vld [vmem:[%s3 + $0x120] sm:$0xff]
  %v569 = vld [vmem:[%s3 + $0x128] sm:$0xff]
  %v570 = vld [vmem:[%s3 + $0x130] sm:$0xff]
  %v571 = vld [vmem:[%s3 + $0x138] sm:$0xff]
  %v572 = vld [vmem:[%s3 + $0x140] sm:$0xff]
  %v573 = vld [vmem:[%s3 + $0x148] sm:$0xff]
  %v574 = vld [vmem:[%s3 + $0x150] sm:$0xff]
  %v575 = vld [vmem:[%s3 + $0x158] sm:$0xff]
  %v576 = vld [vmem:[%s3 + $0x160] sm:$0xff]
  %v577 = vld [vmem:[%s3 + $0x168] sm:$0xff]
  %v578 = vld [vmem:[%s3 + $0x170] sm:$0xff]
  %v579 = vld [vmem:[%s3 + $0x178] sm:$0xff]
  %v580 = vld [vmem:[%s3 + $0x180] sm:$0xff]
  %v581 = vld [vmem:[%s3 + $0x188] sm:$0xff]
  %v582 = vld [vmem:[%s3 + $0x190] sm:$0xff]
  %v583 = vld [vmem:[%s3 + $0x198] sm:$0xff]
  %v584 = vld [vmem:[%s3 + $0x1a0] sm:$0xff]
  %v585 = vld [vmem:[%s3 + $0x1a8] sm:$0xff]
  %v586 = vld [vmem:[%s3 + $0x1b0] sm:$0xff]
  %v587 = vld [vmem:[%s3 + $0x1b8] sm:$0xff]
  %v588 = vld [vmem:[%s3 + $0x1c0] sm:$0xff]
  %v589 = vld [vmem:[%s3 + $0x1c8] sm:$0xff]
  %v590 = vld [vmem:[%s3 + $0x1d0] sm:$0xff]
  %v591 = vld [vmem:[%s3 + $0x1d8] sm:$0xff]
  %v592 = vld [vmem:[%s3 + $0x1e0] sm:$0xff]
  %v593 = vld [vmem:[%s3 + $0x1e8] sm:$0xff]
  %v594 = vld [vmem:[%s3 + $0x1f0] sm:$0xff]
  %v595 = vld [vmem:[%s3 + $0x1f8] sm:$0xff]
  %v596 = vld [vmem:[%s3 + $0x200] sm:$0xff]
  %v597 = vld [vmem:[%s3 + $0x208] sm:$0xff]
  %v598 = vld [vmem:[%s3 + $0x210] sm:$0xff]
  %v599 = vld [vmem:[%s3 + $0x218] sm:$0xff]
  %v600 = vld [vmem:[%s3 + $0x220] sm:$0xff]
  %v601 = vld [vmem:[%s3 + $0x228] sm:$0xff]
  %v602 = vld [vmem:[%s3 + $0x230] sm:$0xff]
  %v603 = vld [vmem:[%s3 + $0x238] sm:$0xff]
  %v604 = vld [vmem:[%s3 + $0x240] sm:$0xff]
  %v605 = vld [vmem:[%s3 + $0x248] sm:$0xff]
  %v606 = vld [vmem:[%s3 + $0x250] sm:$0xff]
  %v607 = vld [vmem:[%s3 + $0x258] sm:$0xff]
  %v608 = vld [vmem:[%s3 + $0x260] sm:$0xff]
  %v609 = vld [vmem:[%s3 + $0x268] sm:$0xff]
  %v610 = vld [vmem:[%s3 + $0x270] sm:$0xff]
  %v611 = vld [vmem:[%s3 + $0x278] sm:$0xff]
  %v612 = vld [vmem:[%s3 + $0x280] sm:$0xff]
  %v613 = vld [vmem:[%s3 + $0x288] sm:$0xff]
  %v614 = vld [vmem:[%s3 + $0x290] sm:$0xff]
  %v615 = vld [vmem:[%s3 + $0x298] sm:$0xff]
  %v616 = vld [vmem:[%s3 + $0x2a0] sm:$0xff]
  %v617 = vld [vmem:[%s3 + $0x2a8] sm:$0xff]
  %v618 = vld [vmem:[%s3 + $0x2b0] sm:$0xff]
  %v619 = vld [vmem:[%s3 + $0x2b8] sm:$0xff]
  %v620 = vld [vmem:[%s3 + $0x2c0] sm:$0xff]
  %v621 = vld [vmem:[%s3 + $0x2c8] sm:$0xff]
  %v622 = vld [vmem:[%s3 + $0x2d0] sm:$0xff]
  %v623 = vld [vmem:[%s3 + $0x2d8] sm:$0xff]
  %v624 = vld [vmem:[%s3 + $0x2e0] sm:$0xff]
  %v625 = vld [vmem:[%s3 + $0x2e8] sm:$0xff]
  %v626 = vld [vmem:[%s3 + $0x2f0] sm:$0xff]
  %v627 = vld [vmem:[%s3 + $0x2f8] sm:$0xff]
  %v628 = vld [vmem:[%s3 + $0x300] sm:$0xff]
  %v629 = vld [vmem:[%s3 + $0x308] sm:$0xff]
  %v630 = vld [vmem:[%s3 + $0x310] sm:$0xff]
  %v631 = vld [vmem:[%s3 + $0x318] sm:$0xff]
  %v632 = vld [vmem:[%s3 + $0x320] sm:$0xff]
  %v633 = vld [vmem:[%s3 + $0x328] sm:$0xff]
  %v634 = vld [vmem:[%s3 + $0x330] sm:$0xff]
  %v635 = vld [vmem:[%s3 + $0x338] sm:$0xff]
  %v636 = vld [vmem:[%s3 + $0x340] sm:$0xff]
  %v637 = vld [vmem:[%s3 + $0x348] sm:$0xff]
  %v638 = vld [vmem:[%s3 + $0x350] sm:$0xff]
  %v639 = vld [vmem:[%s3 + $0x358] sm:$0xff]
  %v640 = vld [vmem:[%s3 + $0x360] sm:$0xff]
  %v641 = vld [vmem:[%s3 + $0x368] sm:$0xff]
  %v642 = vld [vmem:[%s3 + $0x370] sm:$0xff]
  %v643 = vld [vmem:[%s3 + $0x378] sm:$0xff]
  %v644 = vld [vmem:[%s3 + $0x380] sm:$0xff]
  %v645 = vld [vmem:[%s3 + $0x388] sm:$0xff]
  %v646 = vld [vmem:[%s3 + $0x390] sm:$0xff]
  %v647 = vld [vmem:[%s3 + $0x398] sm:$0xff]
  %v648 = vld [vmem:[%s3 + $0x3a0] sm:$0xff]
  %v649 = vld [vmem:[%s3 + $0x3a8] sm:$0xff]
  %v650 = vld [vmem:[%s3 + $0x3b0] sm:$0xff]
  %v651 = vld [vmem:[%s3 + $0x3b8] sm:$0xff]
  %v652 = vld [vmem:[%s3 + $0x3c0] sm:$0xff]
  %v653 = vld [vmem:[%s3 + $0x3c8] sm:$0xff]
  %v654 = vld [vmem:[%s3 + $0x3d0] sm:$0xff]
  %v655 = vld [vmem:[%s3 + $0x3d8] sm:$0xff]
  %v656 = vld [vmem:[%s3 + $0x3e0] sm:$0xff]
  %v657 = vld [vmem:[%s3 + $0x3e8] sm:$0xff]
  %v658 = vld [vmem:[%s3 + $0x3f0] sm:$0xff]
  %v659 = vld [vmem:[%s3 + $0x3f8] sm:$0xff]
  %v660 = vld [vmem:[%s3 + $0x400] sm:$0xff]
  %v661 = vld [vmem:[%s3 + $0x408] sm:$0xff]
  %v662 = vld [vmem:[%s3 + $0x410] sm:$0xff]
  %v663 = vld [vmem:[%s3 + $0x418] sm:$0xff]
  %v664 = vld [vmem:[%s3 + $0x420] sm:$0xff]
  %v665 = vld [vmem:[%s3 + $0x428] sm:$0xff]
  %v666 = vld [vmem:[%s3 + $0x430] sm:$0xff]
  %v667 = vld [vmem:[%s3 + $0x438] sm:$0xff]
  %v668 = vld [vmem:[%s3 + $0x440] sm:$0xff]
  %v669 = vld [vmem:[%s3 + $0x448] sm:$0xff]
  %v670 = vld [vmem:[%s3 + $0x450] sm:$0xff]
  %v671 = vld [vmem:[%s3 + $0x458] sm:$0xff]
  %v672 = vld [vmem:[%s3 + $0x460] sm:$0xff]
  %v673 = vld [vmem:[%s3 + $0x468] sm:$0xff]
  %v674 = vld [vmem:[%s3 + $0x470] sm:$0xff]
  %v675 = vld [vmem:[%s3 + $0x478] sm:$0xff]
  %v676 = vld [vmem:[%s3 + $0x480] sm:$0xff]
  %v677 = vld [vmem:[%s3 + $0x488] sm:$0xff]
  %v678 = vld [vmem:[%s3 + $0x490] sm:$0xff]
  %v679 = vld [vmem:[%s3 + $0x498] sm:$0xff]
  %v680 = vld [vmem:[%s3 + $0x4a0] sm:$0xff]
  %v681 = vld [vmem:[%s3 + $0x4a8] sm:$0xff]
  %v682 = vld [vmem:[%s3 + $0x4b0] sm:$0xff]
  %v683 = vld [vmem:[%s3 + $0x4b8] sm:$0xff]
  %v684 = vld [vmem:[%s3 + $0x4c0] sm:$0xff]
  %v685 = vld [vmem:[%s3 + $0x4c8] sm:$0xff]
  %v686 = vld [vmem:[%s3 + $0x4d0] sm:$0xff]
  %v687 = vld [vmem:[%s3 + $0x4d8] sm:$0xff]
  %v688 = vld [vmem:[%s3 + $0x4e0] sm:$0xff]
  %v689 = vld [vmem:[%s3 + $0x4e8] sm:$0xff]
  %v690 = vld [vmem:[%s3 + $0x4f0] sm:$0xff]
  %v691 = vld [vmem:[%s3 + $0x4f8] sm:$0xff]
  %v692 = vld [vmem:[%s4] sm:$0x3]
  %v694 = vlaneseq
  %v695 = vshrl.u32 %v694, 7
  %v696 = vsub.s32 0, %v695
  %v697 = vrot.slane %v692, %v696
  %v698 = vlaneseq
  %v699 = vshrl.u32 %v698, 7
  %v700 = vsub.s32 1, %v699
  %v701 = vrot.slane %v692, %v700
  %704 = vmatprep.subr.mxu0 %v563
  %705 = vmatpush1.msra.mxu0 %v562
  %706 = vmatprep.subr.mxu0 %v561
  %707 = vmatpush1.msra.mxu0 %v560
  %708 = vmatprep.subr.mxu0 %v559
  %709 = vmatpush1.msra.mxu0 %v558
  %710 = vmatprep.subr.mxu0 %v557
  %711 = vmatpush1.msra.mxu0 %v556
  %712 = vmatprep.subr.mxu0 %v555
  %713 = vmatpush1.msra.mxu0 %v554
  %714 = vmatprep.subr.mxu0 %v553
  %715 = vmatpush1.msra.mxu0 %v552
  %716 = vmatprep.subr.mxu0 %v551
  %717 = vmatpush1.msra.mxu0 %v550
  %718 = vmatprep.subr.mxu0 %v549
  %719 = vmatpush1.msra.mxu0 %v548
  %720 = vmatprep.subr.mxu0 %v547
  %721 = vmatpush1.msra.mxu0 %v546
  %722 = vmatprep.subr.mxu0 %v545
  %723 = vmatpush1.msra.mxu0 %v544
  %724 = vmatprep.subr.mxu0 %v543
  %725 = vmatpush1.msra.mxu0 %v542
  %726 = vmatprep.subr.mxu0 %v541
  %727 = vmatpush1.msra.mxu0 %v540
  %728 = vmatprep.subr.mxu0 %v539
  %729 = vmatpush1.msra.mxu0 %v538
  %730 = vmatprep.subr.mxu0 %v537
  %731 = vmatpush1.msra.mxu0 %v536
  %732 = vmatprep.subr.mxu0 %v535
  %733 = vmatpush1.msra.mxu0 %v534
  %734 = vmatprep.subr.mxu0 %v533
  %735 = vmatpush1.msra.mxu0 %v532
  %736 = vmatprep.subr.mxu0 %v595
  %737 = vmatpush2.msra.mxu0 %v594
  %738 = vmatprep.subr.mxu0 %v593
  %739 = vmatpush2.msra.mxu0 %v592
  %740 = vmatprep.subr.mxu0 %v591
  %741 = vmatpush2.msra.mxu0 %v590
  %742 = vmatprep.subr.mxu0 %v589
  %743 = vmatpush2.msra.mxu0 %v588
  %744 = vmatprep.subr.mxu0 %v587
  %745 = vmatpush2.msra.mxu0 %v586
  %746 = vmatprep.subr.mxu0 %v585
  %747 = vmatpush2.msra.mxu0 %v584
  %748 = vmatprep.subr.mxu0 %v583
  %749 = vmatpush2.msra.mxu0 %v582
  %750 = vmatprep.subr.mxu0 %v581
  %751 = vmatpush2.msra.mxu0 %v580
  %752 = vmatprep.subr.mxu0 %v579
  %753 = vmatpush2.msra.mxu0 %v578
  %754 = vmatprep.subr.mxu0 %v577
  %755 = vmatpush2.msra.mxu0 %v576
  %756 = vmatprep.subr.mxu0 %v575
  %757 = vmatpush2.msra.mxu0 %v574
  %758 = vmatprep.subr.mxu0 %v573
  %759 = vmatpush2.msra.mxu0 %v572
  %760 = vmatprep.subr.mxu0 %v571
  %761 = vmatpush2.msra.mxu0 %v570
  %762 = vmatprep.subr.mxu0 %v569
  %763 = vmatpush2.msra.mxu0 %v568
  %764 = vmatprep.subr.mxu0 %v567
  %765 = vmatpush2.msra.mxu0 %v566
  %766 = vmatprep.subr.mxu0 %v565
  %767 = vmatpush2.msra.mxu0 %v564
  %768 = vmatprep.mubr.f32.mxu0 %v528
  %769 = vmatmul.mubr.f32.gmra.mxu0 %v527
  %v770 = vpop.f32.mrf.mxu0
  %v771 = vadd.f32 %v697, %v770
  %v772 = vpop.f32.mrf.mxu0
  %v773 = vadd.f32 %v701, %v772
  %774 = vdwg.mxu0
  %775 = vmatprep.subr.mxu0 %v627
  %776 = vmatpush1.msra.mxu0 %v626
  %777 = vmatprep.subr.mxu0 %v625
  %778 = vmatpush1.msra.mxu0 %v624
  %779 = vmatprep.subr.mxu0 %v623
  %780 = vmatpush1.msra.mxu0 %v622
  %781 = vmatprep.subr.mxu0 %v621
  %782 = vmatpush1.msra.mxu0 %v620
  %783 = vmatprep.subr.mxu0 %v619
  %784 = vmatpush1.msra.mxu0 %v618
  %785 = vmatprep.subr.mxu0 %v617
  %786 = vmatpush1.msra.mxu0 %v616
  %787 = vmatprep.subr.mxu0 %v615
  %788 = vmatpush1.msra.mxu0 %v614
  %789 = vmatprep.subr.mxu0 %v613
  %790 = vmatpush1.msra.mxu0 %v612
  %791 = vmatprep.subr.mxu0 %v611
  %792 = vmatpush1.msra.mxu0 %v610
  %793 = vmatprep.subr.mxu0 %v609
  %794 = vmatpush1.msra.mxu0 %v608
  %795 = vmatprep.subr.mxu0 %v607
  %796 = vmatpush1.msra.mxu0 %v606
  %797 = vmatprep.subr.mxu0 %v605
  %798 = vmatpush1.msra.mxu0 %v604
  %799 = vmatprep.subr.mxu0 %v603
  %800 = vmatpush1.msra.mxu0 %v602
  %801 = vmatprep.subr.mxu0 %v601
  %802 = vmatpush1.msra.mxu0 %v600
  %803 = vmatprep.subr.mxu0 %v599
  %804 = vmatpush1.msra.mxu0 %v598
  %805 = vmatprep.subr.mxu0 %v597
  %806 = vmatpush1.msra.mxu0 %v596
  %807 = vmatprep.subr.mxu0 %v659
  %808 = vmatpush2.msra.mxu0 %v658
  %809 = vmatprep.subr.mxu0 %v657
  %810 = vmatpush2.msra.mxu0 %v656
  %811 = vmatprep.subr.mxu0 %v655
  %812 = vmatpush2.msra.mxu0 %v654
  %813 = vmatprep.subr.mxu0 %v653
  %814 = vmatpush2.msra.mxu0 %v652
  %815 = vmatprep.subr.mxu0 %v651
  %816 = vmatpush2.msra.mxu0 %v650
  %817 = vmatprep.subr.mxu0 %v649
  %818 = vmatpush2.msra.mxu0 %v648
  %819 = vmatprep.subr.mxu0 %v647
  %820 = vmatpush2.msra.mxu0 %v646
  %821 = vmatprep.subr.mxu0 %v645
  %822 = vmatpush2.msra.mxu0 %v644
  %823 = vmatprep.subr.mxu0 %v643
  %824 = vmatpush2.msra.mxu0 %v642
  %825 = vmatprep.subr.mxu0 %v641
  %826 = vmatpush2.msra.mxu0 %v640
  %827 = vmatprep.subr.mxu0 %v639
  %828 = vmatpush2.msra.mxu0 %v638
  %829 = vmatprep.subr.mxu0 %v637
  %830 = vmatpush2.msra.mxu0 %v636
  %831 = vmatprep.subr.mxu0 %v635
  %832 = vmatpush2.msra.mxu0 %v634
  %833 = vmatprep.subr.mxu0 %v633
  %834 = vmatpush2.msra.mxu0 %v632
  %835 = vmatprep.subr.mxu0 %v631
  %836 = vmatpush2.msra.mxu0 %v630
  %837 = vmatprep.subr.mxu0 %v629
  %838 = vmatpush2.msra.mxu0 %v628
  %839 = vmatprep.mubr.f32.mxu0 %v530
  %840 = vmatmul.mubr.f32.gmra.mxu0 %v529
  %v841 = vpop.f32.mrf.mxu0
  %v842 = vadd.f32 %v771, %v841
  %v843 = vpop.f32.mrf.mxu0
  %v844 = vadd.f32 %v773, %v843
  %845 = vdwg.mxu0
  %846 = vmatprep.subr.mxu0 %v691
  %847 = vmatpush1.msra.mxu0 %v690
  %848 = vmatprep.subr.mxu0 %v689
  %849 = vmatpush1.msra.mxu0 %v688
  %850 = vmatprep.subr.mxu0 %v687
  %851 = vmatpush1.msra.mxu0 %v686
  %852 = vmatprep.subr.mxu0 %v685
  %853 = vmatpush1.msra.mxu0 %v684
  %854 = vmatprep.subr.mxu0 %v683
  %855 = vmatpush1.msra.mxu0 %v682
  %856 = vmatprep.subr.mxu0 %v681
  %857 = vmatpush1.msra.mxu0 %v680
  %858 = vmatprep.subr.mxu0 %v679
  %859 = vmatpush1.msra.mxu0 %v678
  %860 = vmatprep.subr.mxu0 %v677
  %861 = vmatpush1.msra.mxu0 %v676
  %862 = vmatprep.subr.mxu0 %v675
  %863 = vmatpush1.msra.mxu0 %v674
  %864 = vmatprep.subr.mxu0 %v673
  %865 = vmatpush1.msra.mxu0 %v672
  %866 = vmatprep.subr.mxu0 %v671
  %867 = vmatpush1.msra.mxu0 %v670
  %868 = vmatprep.subr.mxu0 %v669
  %869 = vmatpush1.msra.mxu0 %v668
  %870 = vmatprep.subr.mxu0 %v667
  %871 = vmatpush1.msra.mxu0 %v666
  %872 = vmatprep.subr.mxu0 %v665
  %873 = vmatpush1.msra.mxu0 %v664
  %874 = vmatprep.subr.mxu0 %v663
  %875 = vmatpush1.msra.mxu0 %v662
  %876 = vmatprep.subr.mxu0 %v661
  %877 = vmatpush1.msra.mxu0 %v660
  %878 = vmatprep.subr.mxu0 0.0
  %879 = vmatpush2.msra.mxu0 0.0
  %880 = vmatprep.subr.mxu0 0.0
  %881 = vmatpush2.msra.mxu0 0.0
  %882 = vmatprep.subr.mxu0 0.0
  %883 = vmatpush2.msra.mxu0 0.0
  %884 = vmatprep.subr.mxu0 0.0
  %885 = vmatpush2.msra.mxu0 0.0
  %886 = vmatprep.subr.mxu0 0.0
  %887 = vmatpush2.msra.mxu0 0.0
  %888 = vmatprep.subr.mxu0 0.0
  %889 = vmatpush2.msra.mxu0 0.0
  %890 = vmatprep.subr.mxu0 0.0
  %891 = vmatpush2.msra.mxu0 0.0
  %892 = vmatprep.subr.mxu0 0.0
  %893 = vmatpush2.msra.mxu0 0.0
  %894 = vmatprep.subr.mxu0 0.0
  %895 = vmatpush2.msra.mxu0 0.0
  %896 = vmatprep.subr.mxu0 0.0
  %897 = vmatpush2.msra.mxu0 0.0
  %898 = vmatprep.subr.mxu0 0.0
  %899 = vmatpush2.msra.mxu0 0.0
  %900 = vmatprep.subr.mxu0 0.0
  %901 = vmatpush2.msra.mxu0 0.0
  %902 = vmatprep.subr.mxu0 0.0
  %903 = vmatpush2.msra.mxu0 0.0
  %904 = vmatprep.subr.mxu0 0.0
  %905 = vmatpush2.msra.mxu0 0.0
  %906 = vmatprep.subr.mxu0 0.0
  %907 = vmatpush2.msra.mxu0 0.0
  %908 = vmatprep.subr.mxu0 0.0
  %909 = vmatpush2.msra.mxu0 0.0
  %910 = vmatprep.mubr.f32.mxu0 0.0
  %911 = vmatmul.mubr.f32.gmra.mxu0 %v531
  %v912 = vpop.f32.mrf.mxu0
  %v913 = vadd.f32 %v842, %v912
  %v914 = vpop.f32.mrf.mxu0
  %v915 = vadd.f32 %v844, %v914
  %916 = vdwg.mxu0
  %v917 = vmax.f32 %v913, 0.0
  %v918 = vmax.f32 %v915, 0.0
  %v919 = vld [vmem:[%s5] sm:$0xff]
  %v920 = vld [vmem:[%s5 + $0x8] sm:$0xff]
  %v921 = vld [vmem:[%s5 + $0x10] sm:$0xff]
  %v922 = vld [vmem:[%s5 + $0x18] sm:$0xff]
  %v923 = vld [vmem:[%s5 + $0x20] sm:$0xff]
  %v924 = vld [vmem:[%s5 + $0x28] sm:$0xff]
  %v925 = vld [vmem:[%s5 + $0x30] sm:$0xff]
  %v926 = vld [vmem:[%s5 + $0x38] sm:$0xff]
  %v927 = vld [vmem:[%s5 + $0x40] sm:$0xff]
  %v928 = vld [vmem:[%s5 + $0x48] sm:$0xff]
  %v929 = vld [vmem:[%s5 + $0x50] sm:$0xff]
  %v930 = vld [vmem:[%s5 + $0x58] sm:$0xff]
  %v931 = vld [vmem:[%s5 + $0x60] sm:$0xff]
  %v932 = vld [vmem:[%s5 + $0x68] sm:$0xff]
  %v933 = vld [vmem:[%s5 + $0x70] sm:$0xff]
  %v934 = vld [vmem:[%s5 + $0x78] sm:$0xff]
  %v935 = vld [vmem:[%s5 + $0x80] sm:$0xff]
  %v936 = vld [vmem:[%s5 + $0x88] sm:$0xff]
  %v937 = vld [vmem:[%s5 + $0x90] sm:$0xff]
  %v938 = vld [vmem:[%s5 + $0x98] sm:$0xff]
  %v939 = vld [vmem:[%s5 + $0xa0] sm:$0xff]
  %v940 = vld [vmem:[%s5 + $0xa8] sm:$0xff]
  %v941 = vld [vmem:[%s5 + $0xb0] sm:$0xff]
  %v942 = vld [vmem:[%s5 + $0xb8] sm:$0xff]
  %v943 = vld [vmem:[%s5 + $0xc0] sm:$0xff]
  %v944 = vld [vmem:[%s5 + $0xc8] sm:$0xff]
  %v945 = vld [vmem:[%s5 + $0xd0] sm:$0xff]
  %v946 = vld [vmem:[%s5 + $0xd8] sm:$0xff]
  %v947 = vld [vmem:[%s5 + $0xe0] sm:$0xff]
  %v948 = vld [vmem:[%s5 + $0xe8] sm:$0xff]
  %v949 = vld [vmem:[%s5 + $0xf0] sm:$0xff]
  %v950 = vld [vmem:[%s5 + $0xf8] sm:$0xff]
  %v951 = vld [vmem:[%s6] sm:$0x1]
  %v953 = vlaneseq
  %v954 = vshrl.u32 %v953, 7
  %v955 = vsub.s32 0, %v954
  %v956 = vrot.slane %v951, %v955
  %958 = vmatprep.subr.mxu0 0.0
  %959 = vmatpush1.msra.mxu0 %v934
  %960 = vmatprep.subr.mxu0 0.0
  %961 = vmatpush1.msra.mxu0 %v933
  %962 = vmatprep.subr.mxu0 0.0
  %963 = vmatpush1.msra.mxu0 %v932
  %964 = vmatprep.subr.mxu0 0.0
  %965 = vmatpush1.msra.mxu0 %v931
  %966 = vmatprep.subr.mxu0 0.0
  %967 = vmatpush1.msra.mxu0 %v930
  %968 = vmatprep.subr.mxu0 0.0
  %969 = vmatpush1.msra.mxu0 %v929
  %970 = vmatprep.subr.mxu0 0.0
  %971 = vmatpush1.msra.mxu0 %v928
  %972 = vmatprep.subr.mxu0 0.0
  %973 = vmatpush1.msra.mxu0 %v927
  %974 = vmatprep.subr.mxu0 0.0
  %975 = vmatpush1.msra.mxu0 %v926
  %976 = vmatprep.subr.mxu0 0.0
  %977 = vmatpush1.msra.mxu0 %v925
  %978 = vmatprep.subr.mxu0 0.0
  %979 = vmatpush1.msra.mxu0 %v924
  %980 = vmatprep.subr.mxu0 0.0
  %981 = vmatpush1.msra.mxu0 %v923
  %982 = vmatprep.subr.mxu0 0.0
  %983 = vmatpush1.msra.mxu0 %v922
  %984 = vmatprep.subr.mxu0 0.0
  %985 = vmatpush1.msra.mxu0 %v921
  %986 = vmatprep.subr.mxu0 0.0
  %987 = vmatpush1.msra.mxu0 %v920
  %988 = vmatprep.subr.mxu0 0.0
  %989 = vmatpush1.msra.mxu0 %v919
  %990 = vmatprep.subr.mxu0 0.0
  %991 = vmatpush2.msra.mxu0 %v950
  %992 = vmatprep.subr.mxu0 0.0
  %993 = vmatpush2.msra.mxu0 %v949
  %994 = vmatprep.subr.mxu0 0.0
  %995 = vmatpush2.msra.mxu0 %v948
  %996 = vmatprep.subr.mxu0 0.0
  %997 = vmatpush2.msra.mxu0 %v947
  %998 = vmatprep.subr.mxu0 0.0
  %999 = vmatpush2.msra.mxu0 %v946
  %1000 = vmatprep.subr.mxu0 0.0
  %1001 = vmatpush2.msra.mxu0 %v945
  %1002 = vmatprep.subr.mxu0 0.0
  %1003 = vmatpush2.msra.mxu0 %v944
  %1004 = vmatprep.subr.mxu0 0.0
  %1005 = vmatpush2.msra.mxu0 %v943
  %1006 = vmatprep.subr.mxu0 0.0
  %1007 = vmatpush2.msra.mxu0 %v942
  %1008 = vmatprep.subr.mxu0 0.0
  %1009 = vmatpush2.msra.mxu0 %v941
  %1010 = vmatprep.subr.mxu0 0.0
  %1011 = vmatpush2.msra.mxu0 %v940
  %1012 = vmatprep.subr.mxu0 0.0
  %1013 = vmatpush2.msra.mxu0 %v939
  %1014 = vmatprep.subr.mxu0 0.0
  %1015 = vmatpush2.msra.mxu0 %v938
  %1016 = vmatprep.subr.mxu0 0.0
  %1017 = vmatpush2.msra.mxu0 %v937
  %1018 = vmatprep.subr.mxu0 0.0
  %1019 = vmatpush2.msra.mxu0 %v936
  %1020 = vmatprep.subr.mxu0 0.0
  %1021 = vmatpush2.msra.mxu0 %v935
  %1022 = vmatprep.mubr.f32.mxu0 %v918
  %1023 = vmatmul.mubr.f32.gmra.mxu0 %v917
  %v1024 = vpop.f32.mrf.mxu0
  %v1025 = vadd.f32 %v956, %v1024
  %v1026 = vpop.f32.mrf.mxu0
  %1027 = vdwg.mxu0
  %v1028 = vmax.f32 %v1025, 0.0
  %v1029 = vld [vmem:[%s7] sm:$0xff]
  %v1030 = vld [vmem:[%s7 + $0x8] sm:$0xff]
  %v1031 = vld [vmem:[%s7 + $0x10] sm:$0xff]
  %v1032 = vld [vmem:[%s7 + $0x18] sm:$0xff]
  %v1033 = vld [vmem:[%s7 + $0x20] sm:$0xff]
  %v1034 = vld [vmem:[%s7 + $0x28] sm:$0xff]
  %v1035 = vld [vmem:[%s7 + $0x30] sm:$0xff]
  %v1036 = vld [vmem:[%s7 + $0x38] sm:$0xff]
  %v1037 = vld [vmem:[%s8] sm:$0x1]
  %v1039 = vlaneseq
  %v1040 = vshrl.u32 %v1039, 7
  %v1041 = vsub.s32 0, %v1040
  %v1042 = vrot.slane %v1037, %v1041
  %vm1044 = vcmask 523264
  %v1046 = vsel %vm1044, %v1028, 0
  %1048 = vmatprep.subr.mxu0 0.0
  %1049 = vmatpush1.msra.mxu0 0.0
  %1050 = vmatprep.subr.mxu0 0.0
  %1051 = vmatpush1.msra.mxu0 0.0
  %1052 = vmatprep.subr.mxu0 0.0
  %1053 = vmatpush1.msra.mxu0 0.0
  %1054 = vmatprep.subr.mxu0 0.0
  %1055 = vmatpush1.msra.mxu0 0.0
  %1056 = vmatprep.subr.mxu0 0.0
  %1057 = vmatpush1.msra.mxu0 0.0
  %1058 = vmatprep.subr.mxu0 0.0
  %1059 = vmatpush1.msra.mxu0 0.0
  %1060 = vmatprep.subr.mxu0 0.0
  %1061 = vmatpush1.msra.mxu0 0.0
  %1062 = vmatprep.subr.mxu0 0.0
  %1063 = vmatpush1.msra.mxu0 0.0
  %1064 = vmatprep.subr.mxu0 0.0
  %1065 = vmatpush1.msra.mxu0 %v1036
  %1066 = vmatprep.subr.mxu0 0.0
  %1067 = vmatpush1.msra.mxu0 %v1035
  %1068 = vmatprep.subr.mxu0 0.0
  %1069 = vmatpush1.msra.mxu0 %v1034
  %1070 = vmatprep.subr.mxu0 0.0
  %1071 = vmatpush1.msra.mxu0 %v1033
  %1072 = vmatprep.subr.mxu0 0.0
  %1073 = vmatpush1.msra.mxu0 %v1032
  %1074 = vmatprep.subr.mxu0 0.0
  %1075 = vmatpush1.msra.mxu0 %v1031
  %1076 = vmatprep.subr.mxu0 0.0
  %1077 = vmatpush1.msra.mxu0 %v1030
  %1078 = vmatprep.subr.mxu0 0.0
  %1079 = vmatpush1.msra.mxu0 %v1029
  %1080 = vmatprep.subr.mxu0 0.0
  %1081 = vmatpush2.msra.mxu0 0.0
  %1082 = vmatprep.subr.mxu0 0.0
  %1083 = vmatpush2.msra.mxu0 0.0
  %1084 = vmatprep.subr.mxu0 0.0
  %1085 = vmatpush2.msra.mxu0 0.0
  %1086 = vmatprep.subr.mxu0 0.0
  %1087 = vmatpush2.msra.mxu0 0.0
  %1088 = vmatprep.subr.mxu0 0.0
  %1089 = vmatpush2.msra.mxu0 0.0
  %1090 = vmatprep.subr.mxu0 0.0
  %1091 = vmatpush2.msra.mxu0 0.0
  %1092 = vmatprep.subr.mxu0 0.0
  %1093 = vmatpush2.msra.mxu0 0.0
  %1094 = vmatprep.subr.mxu0 0.0
  %1095 = vmatpush2.msra.mxu0 0.0
  %1096 = vmatprep.subr.mxu0 0.0
  %1097 = vmatpush2.msra.mxu0 0.0
  %1098 = vmatprep.subr.mxu0 0.0
  %1099 = vmatpush2.msra.mxu0 0.0
  %1100 = vmatprep.subr.mxu0 0.0
  %1101 = vmatpush2.msra.mxu0 0.0
  %1102 = vmatprep.subr.mxu0 0.0
  %1103 = vmatpush2.msra.mxu0 0.0
  %1104 = vmatprep.subr.mxu0 0.0
  %1105 = vmatpush2.msra.mxu0 0.0
  %1106 = vmatprep.subr.mxu0 0.0
  %1107 = vmatpush2.msra.mxu0 0.0
  %1108 = vmatprep.subr.mxu0 0.0
  %1109 = vmatpush2.msra.mxu0 0.0
  %1110 = vmatprep.subr.mxu0 0.0
  %1111 = vmatpush2.msra.mxu0 0.0
  %1112 = vmatprep.mubr.f32.mxu0 0.0
  %1113 = vmatmul.mubr.f32.gmra.mxu0 %v1046
  %v1114 = vpop.f32.mrf.mxu0
  %v1115 = vadd.f32 %v1042, %v1114
  %v1116 = vpop.f32.mrf.mxu0
  %1117 = vdwg.mxu0
  %v1118 = vsub.f32 0.0, %v1115
  %v1119 = vmul.f32 %v1118, 1.442695
  %v1120 = vpow.pop %v1119
  %v1121 = vadd.f32 %v1120, 1.0
  %v1122 = vrcp.pop %v1121
  %v1123 = vmul.f32 1.0, %v1122
  %1124 = vst [vmem:[%s9] sm:$0xff] %v1123
  // Predicated region
  $region38: #{cnn_forward.1} parent=0 // pred_check
    _
  $region39: #{cnn_forward.1} parent=0 // pred_check_branch
    %1126 = sbr.rel (0) target = $region41
  $region40: #{cnn_forward.1} parent=0 // pred_region
    _
  $region41: #{cnn_forward.1} parent=0 // pred_fallthru
    _
  // Predicated region
  $region42: #{cnn_forward.1} parent=0 // pred_check
    _
  $region43: #{cnn_forward.1} parent=0 // pred_check_branch
    %1128 = sbr.rel (0) target = $region45
  $region44: #{cnn_forward.1} parent=0 // pred_region
    _
  $region45: #{cnn_forward.1} parent=0 // pred_fallthru
    _

</llo_original>
